<compile_context>
chip_gen: v7x
topology: tpu7x:2x2x1
jax: 0.10.0
libtpu: 0.0.40
codegen_flags: <defaults>
</compile_context>

<pallas_src>
import functools

import jax
import jax.numpy as jnp
from jax import lax
from jax.experimental import pallas as pl
from jax.experimental.pallas import tpu as pltpu


def _round_up(x, m):
    return ((x + m - 1) // m) * m


def _gelu(x):
    # TODO(synk): PyTorch nn.GELU() is erf-exact; tanh approximation used here
    # (EUP-friendly, ~1e-3 diff, guaranteed Mosaic lowering).
    return jax.nn.gelu(x, approximate=True)


# explicit scoped-VMEM budget with headroom (<= 64 MiB physical on v7x, < 128 MiB elsewhere)
_VMEM_LIMIT = 48 * 1024 * 1024


# ------------------------------------------------------------------
# Pallas kernel: tiled linear (+ optional GELU), bf16 in / f32 acc
# ------------------------------------------------------------------

def _linear_kernel(x_ref, w_ref, b_ref, o_ref, *, act):
    y = jnp.dot(x_ref[...], w_ref[...], preferred_element_type=jnp.float32) + b_ref[...]
    if act == "gelu":
        y = _gelu(y)
    o_ref[...] = y


def linear_pallas(x2d, w, b, act="gelu", tile_m=512):
    """y = act(x2d @ w + b); x2d: [M,K], w: [K,N], b: [N].  Tiled over M."""
    M, K = x2d.shape
    N = w.shape[1]
    TM = min(tile_m, _round_up(M, 8))
    Mp = _round_up(M, TM)
    if Mp != M:
        x2d = jnp.pad(x2d, ((0, Mp - M), (0, 0)))
    out = pl.pallas_call(
        functools.partial(_linear_kernel, act=act),
        out_shape=jax.ShapeDtypeStruct((Mp, N), jnp.float32),
        grid=(Mp // TM,),
        in_specs=[pl.BlockSpec((TM, K), lambda i: (i, 0)),
                  pl.BlockSpec((K, N), lambda i: (0, 0)),
                  pl.BlockSpec((1, N), lambda i: (0, 0))],
        out_specs=pl.BlockSpec((TM, N), lambda i: (i, 0)),
        compiler_params=pltpu.CompilerParams(
            dimension_semantics=("parallel",),
            vmem_limit_bytes=_VMEM_LIMIT),
    )(x2d.astype(jnp.bfloat16), w.astype(jnp.bfloat16),
      b.astype(jnp.float32).reshape(1, N))
    return out[:M]


# ------------------------------------------------------------------
# Pallas kernel: masked max-pool of pieces -> words
#   output block (full L) resident across the piece-chunk grid axis;
#   per-word-row 2-D select + cross-sublane max (no 3-D intermediate)
# ------------------------------------------------------------------

def _masked_max_kernel(minv_ref, emb_ref, mask_ref, o_ref, *, l_rows):
    minv = minv_ref[0]                                   # SMEM scalar (f32)

    @pl.when(pl.program_id(2) == 0)
    def _():
        o_ref[...] = jnp.full(o_ref.shape, minv, o_ref.dtype)

    emb = emb_ref[0]                                     # (CH, HB)   bf16
    mskb = mask_ref[0]                                   # (CH, L_pad) f32 (piece-major)
    minv_b = minv.astype(jnp.bfloat16)
    # TODO(synk): for very long sentences switch this static row loop to lax.fori_loop.
    for l in range(l_rows):
        cond = mskb[:, l:l + 1] > 0.0                    # (CH, 1)
        masked = jnp.where(cond, emb, minv_b)            # (CH, HB) bf16 working set only
        rmax = jnp.max(masked, axis=0, keepdims=True).astype(jnp.float32)   # (1, HB)
        o_ref[0, l:l + 1, :] = jnp.maximum(o_ref[0, l:l + 1, :], rmax)


def masked_max_pool(bert_embs, pieces2word, min_value):
    """word_reps[b,l,h] = max_p( pieces2word[b,l,p] ? bert_embs[b,p,h] : min_value )."""
    B, Lp, H = bert_embs.shape
    L = pieces2word.shape[1]
    L_pad = _round_up(L, 8)
    CH = 128 if Lp > 128 else _round_up(Lp, 8)
    Lp_pad = _round_up(Lp, CH)
    HB = 256 if (H > 256 and H % 256 == 0) else H

    emb = jnp.pad(bert_embs.astype(jnp.bfloat16), ((0, 0), (0, Lp_pad - Lp), (0, 0)))
    # piece-major mask so the piece axis lands on sublanes (same as emb's layout)
    mskT = jnp.transpose(pieces2word.astype(jnp.float32), (0, 2, 1))
    mskT = jnp.pad(mskT, ((0, 0), (0, Lp_pad - Lp), (0, L_pad - L)))
    minv = jnp.reshape(min_value.astype(jnp.float32), (1,))

    out = pl.pallas_call(
        functools.partial(_masked_max_kernel, l_rows=L_pad),
        out_shape=jax.ShapeDtypeStruct((B, L_pad, H), jnp.float32),
        grid=(B, H // HB, Lp_pad // CH),
        in_specs=[pl.BlockSpec(memory_space=pltpu.MemorySpace.SMEM),
                  pl.BlockSpec((1, CH, HB), lambda b, h, c: (b, c, h)),
                  pl.BlockSpec((1, CH, L_pad), lambda b, h, c: (b, c, 0))],
        out_specs=pl.BlockSpec((1, L_pad, HB), lambda b, h, c: (b, 0, h)),
        compiler_params=pltpu.CompilerParams(
            dimension_semantics=("parallel", "parallel", "arbitrary"),
            vmem_limit_bytes=_VMEM_LIMIT),
    )(minv, emb, mskT)
    return out[:, :L]


# ------------------------------------------------------------------
# Pallas kernel: biaffine einsum, tiled over query rows, output in (B, L, L, O)
# ------------------------------------------------------------------

def _biaffine_kernel(x_ref, y_ref, wf_ref, o_ref, *, n_out, Dp):
    x = x_ref[0]                                        # (TLq, Dp) bf16
    y = y_ref[0]                                        # (L,   Dp) bf16
    # Stage 1 (heads folded): u[x, o*Dp + j] = sum_i X[x,i] W[o,i,j]
    u = jnp.dot(x, wf_ref[...], preferred_element_type=jnp.float32)   # (TLq, O*Dp)
    # TODO(synk): bf16 round-trip between the two stages (reference einsum is f32).
    u = u.astype(jnp.bfloat16)
    heads = []
    for o in range(n_out):
        uo = u[:, o * Dp:(o + 1) * Dp]                  # (TLq, Dp)
        heads.append(lax.dot_general(uo, y, (((1,), (1,)), ((), ())),
                                     preferred_element_type=jnp.float32))  # (TLq, L)
    # TODO(synk): o stays in the minor (lane-sparse) dim to match the consumer layout;
    # a lane-dense (B, O, L, L) layout would need a matching res-block rewrite.
    o_ref[0] = jnp.stack(heads, axis=-1)                # (TLq, L, O)


def biaffine(x_aug, y_aug, w, row_tile=128):
    """einsum('bxi,oij,byj->boxy').permute(0,2,3,1) -> [B, L, L, O], emitted in-kernel."""
    B, L, D = x_aug.shape
    O = w.shape[0]
    Dp = _round_up(D, 8)                                # pad contraction dim
    TLq = row_tile if L >= row_tile else _round_up(L, 8)
    Lr = _round_up(L, TLq)
    xb = jnp.pad(x_aug, ((0, 0), (0, Lr - L), (0, Dp - D))).astype(jnp.bfloat16)
    yb = jnp.pad(y_aug, ((0, 0), (0, 0), (0, Dp - D))).astype(jnp.bfloat16)
    wp = jnp.pad(w, ((0, 0), (0, Dp - D), (0, Dp - D)))
    wf = jnp.transpose(wp, (1, 0, 2)).reshape(Dp, O * Dp).astype(jnp.bfloat16)
    out = pl.pallas_call(
        functools.partial(_biaffine_kernel, n_out=O, Dp=Dp),
        out_shape=jax.ShapeDtypeStruct((B, Lr, L, O), jnp.float32),
        grid=(B, Lr // TLq),
        in_specs=[pl.BlockSpec((1, TLq, Dp), lambda b, r: (b, r, 0)),
                  pl.BlockSpec((1, L, Dp), lambda b, r: (b, 0, 0)),
                  pl.BlockSpec((Dp, O * Dp), lambda b, r: (0, 0))],
        out_specs=pl.BlockSpec((1, TLq, L, O), lambda b, r: (b, r, 0, 0)),
        compiler_params=pltpu.CompilerParams(
            dimension_semantics=("parallel", "parallel"),
            vmem_limit_bytes=_VMEM_LIMIT),
    )(xb, yb, wf)
    return out[:, :L]


# ------------------------------------------------------------------
# Pallas kernel: fused residual block, row-tiled with a 1-row halo
#   mask/concat -> 1x1 conv + GELU (halo rows recomputed in-kernel)
#   -> 3x3 conv as ONE im2col matmul (K = 9*Ch) + GELU -> mlp_rel + GELU -> residual
# ------------------------------------------------------------------

def _pick_row_tile(L):
    for tr in (16, 8):
        if L % tr == 0 and L // tr >= 2:
            return tr
    return L


def _res_block_kernel(de_m, de_a, de_b, o1_m, o1_a, o1_b, mk_m, mk_a, mk_b,
                      w1_ref, b1_ref, w3_ref, b3_ref, wr_ref, br_ref, out_ref,
                      *, TR, L, Ch, cls):
    r = pl.program_id(1)
    n_r = pl.num_programs(1)

    def h_rows(de_blk, o1_blk, mk_blk, nrows):
        # masked concat [dis|reg|o1] -> single 1x1-conv matmul -> bias -> GELU
        de2 = de_blk.reshape(nrows * L, de_blk.shape[-1])
        o12 = o1_blk.reshape(nrows * L, cls).astype(jnp.bfloat16)
        mk2 = mk_blk.reshape(nrows * L, 1)
        x = jnp.concatenate([de2, o12], axis=-1)
        x = jnp.where(mk2 > 0.0, x, jnp.zeros_like(x))
        s = jnp.dot(x, w1_ref[...], preferred_element_type=jnp.float32) + b1_ref[...]
        return _gelu(s).astype(jnp.bfloat16).reshape(nrows, L, Ch)

    h_m = h_rows(de_m[0], o1_m[0], mk_m[0], TR)          # (TR, L, Ch)
    h_a = h_rows(de_a[0], o1_a[0], mk_a[0], 1)           # (1,  L, Ch)
    h_b = h_rows(de_b[0], o1_b[0], mk_b[0], 1)           # (1,  L, Ch)
    # zero the halo rows at the top/bottom of the image (conv2d padding=1 semantics)
    h_a = jnp.where(r == 0, jnp.zeros_like(h_a), h_a)
    h_b = jnp.where(r == n_r - 1, jnp.zeros_like(h_b), h_b)

    # assemble (TR+2, L+2, Ch) with zero column halo, all in VMEM
    h_ext = jnp.concatenate([h_a, h_m, h_b], axis=0)     # (TR+2, L, Ch)
    zc = jnp.zeros((TR + 2, 1, Ch), jnp.bfloat16)
    h_ext = jnp.concatenate([zc, h_ext, zc], axis=1)     # (TR+2, L+2, Ch)

    # im2col -> single MXU matmul with contraction depth 9*Ch
    cols = []
    for di in range(3):
        for dj in range(3):
            cols.append(h_ext[di:di + TR, dj:dj + L, :].reshape(TR * L, Ch))
    patches = jnp.concatenate(cols, axis=-1)             # (TR*L, 9*Ch)
    g = jnp.dot(patches, w3_ref[...], preferred_element_type=jnp.float32) + b3_ref[...]
    g = _gelu(g).astype(jnp.bfloat16)                    # (TR*L, Ch)

    # mlp_rel + GELU + residual
    rel = jnp.dot(g, wr_ref[...], preferred_element_type=jnp.float32) + br_ref[...]
    out = o1_m[0].reshape(TR * L, cls) + _gelu(rel)
    out_ref[0] = out.reshape(TR, L, cls)


def res_block_fused(o1, de_emb, grid_mask2d, blk):
    B, L, _, cls = o1.shape
    Dde = de_emb.shape[-1]
    Ch = blk['conv1x1_b'].shape[0]
    TR = _pick_row_tile(L)
    n_r = L // TR
    last_row = L - 1

    def row_main(b, r):
        return (b, r, 0, 0)

    def row_above(b, r):
        return (b, jnp.maximum(r * TR - 1, 0), 0, 0)

    def row_below(b, r):
        return (b, jnp.minimum(r * TR + TR, last_row), 0, 0)

    de = de_emb.astype(jnp.bfloat16)
    o1f = o1.astype(jnp.float32)
    mk = grid_mask2d.reshape(B, L, L, 1).astype(jnp.float32)
    w1 = blk['conv1x1_w'].astype(jnp.bfloat16)           # (cin, Ch), rows = [dis|reg|o1]
    w3 = blk['conv3x3_w'].reshape(9 * Ch, Ch).astype(jnp.bfloat16)
    wr = blk['mlp_rel_w'].astype(jnp.bfloat16)
    cin = w1.shape[0]

    out = pl.pallas_call(
        functools.partial(_res_block_kernel, TR=TR, L=L, Ch=Ch, cls=cls),
        out_shape=jax.ShapeDtypeStruct((B, L, L, cls), jnp.float32),
        grid=(B, n_r),
        in_specs=[pl.BlockSpec((1, TR, L, Dde), row_main),
                  pl.BlockSpec((1, 1, L, Dde), row_above),
                  pl.BlockSpec((1, 1, L, Dde), row_below),
                  pl.BlockSpec((1, TR, L, cls), row_main),
                  pl.BlockSpec((1, 1, L, cls), row_above),
                  pl.BlockSpec((1, 1, L, cls), row_below),
                  pl.BlockSpec((1, TR, L, 1), row_main),
                  pl.BlockSpec((1, 1, L, 1), row_above),
                  pl.BlockSpec((1, 1, L, 1), row_below),
                  pl.BlockSpec((cin, Ch), lambda b, r: (0, 0)),
                  pl.BlockSpec((1, Ch), lambda b, r: (0, 0)),
                  pl.BlockSpec((9 * Ch, Ch), lambda b, r: (0, 0)),
                  pl.BlockSpec((1, Ch), lambda b, r: (0, 0)),
                  pl.BlockSpec((Ch, cls), lambda b, r: (0, 0)),
                  pl.BlockSpec((1, cls), lambda b, r: (0, 0))],
        out_specs=pl.BlockSpec((1, TR, L, cls), row_main),
        compiler_params=pltpu.CompilerParams(
            dimension_semantics=("parallel", "parallel"),
            vmem_limit_bytes=_VMEM_LIMIT),
    )(de, de, de, o1f, o1f, o1f, mk, mk, mk,
      w1,
      blk['conv1x1_b'].reshape(1, Ch).astype(jnp.float32),
      w3,
      blk['conv3x3_b'].reshape(1, Ch).astype(jnp.float32),
      wr,
      blk['mlp_rel_b'].reshape(1, cls).astype(jnp.float32))
    return out


# ------------------------------------------------------------------
# Plain-JAX glue: rotary, BiLSTM recurrence, parameter init, full forward
# ------------------------------------------------------------------

def rotary_position_embedding(qw, kw):
    # Matches the reference's cat-based construction of qw2/kw2 exactly.
    B, S, D = qw.shape
    pos = jnp.arange(S, dtype=jnp.float32)[:, None]                 # (S,1)
    idx = jnp.arange(D // 2, dtype=jnp.float32)
    idx = jnp.power(10000.0, -2.0 * idx / D)                        # (D/2,)
    pe = pos * idx                                                  # (S, D/2)
    pe = jnp.stack([jnp.sin(pe), jnp.cos(pe)], axis=-1)             # (S, D/2, 2)
    pe = jnp.broadcast_to(pe[None], (B, S, D // 2, 2)).reshape(B, S, D)
    cos_pos = jnp.repeat(pe[..., 1::2], 2, axis=-1)
    sin_pos = jnp.repeat(pe[..., ::2], 2, axis=-1)
    qw2 = jnp.concatenate([-qw[..., 1::2], qw[..., ::2]], axis=-1)
    qw = qw * cos_pos + qw2 * sin_pos
    kw2 = jnp.concatenate([-kw[..., 1::2], kw[..., ::2]], axis=-1)
    kw = kw * cos_pos + kw2 * sin_pos
    return qw, kw


def _bilstm(xp_f, xp_b, lengths, Whh_f, Whh_b):
    """BiLSTM recurrence with pack_padded_sequence semantics (zeros past each length).

    Both directions stacked into ONE lax.scan with a block-diagonal recurrent weight,
    so the per-step matmul runs at (B, 2*hh) @ (2*hh, 8*hh).
    """
    # TODO(synk): the sequential LSTM recurrence has no clean grid-parallel Pallas form;
    # the large input projection is hoisted out and done as one Pallas matmul instead.
    B, T, G = xp_f.shape
    hh = Whh_f.shape[1]
    W_bd = jnp.zeros((2 * hh, 2 * G), jnp.float32)
    W_bd = W_bd.at[:hh, :G].set(Whh_f.T).at[hh:, G:].set(Whh_b.T)

    xs_f = jnp.transpose(xp_f, (1, 0, 2))                # (T, B, 4hh)
    xs_b = jnp.transpose(xp_b, (1, 0, 2))[::-1]
    ts_f = jnp.arange(T)
    ts_b = T - 1 - jnp.arange(T)

    def cell(gates, h, c, valid):
        i, f, g, o = jnp.split(gates, 4, axis=-1)
        i = jax.nn.sigmoid(i)
        f = jax.nn.sigmoid(f)
        g = jnp.tanh(g)
        o = jax.nn.sigmoid(o)
        c_new = f * c + i * g
        h_new = o * jnp.tanh(c_new)
        return (jnp.where(valid, h_new, h), jnp.where(valid, c_new, c),
                jnp.where(valid, h_new, 0.0))

    def step(carry, inp):
        h, c = carry                                     # (B, 2hh) each
        xf, xb, tf, tb = inp
        gates = jnp.concatenate([xf, xb], axis=-1) + h @ W_bd   # (B, 8hh)
        vf = (tf < lengths)[:, None]
        vb = (tb < lengths)[:, None]
        hf, cf, of_ = cell(gates[:, :G], h[:, :hh], c[:, :hh], vf)
        hb, cb, ob_ = cell(gates[:, G:], h[:, hh:], c[:, hh:], vb)
        carry2 = (jnp.concatenate([hf, hb], axis=-1), jnp.concatenate([cf, cb], axis=-1))
        return carry2, (of_, ob_)

    init = (jnp.zeros((B, 2 * hh), jnp.float32), jnp.zeros((B, 2 * hh), jnp.float32))
    _, (outs_f, outs_b) = lax.scan(step, init, (xs_f, xs_b, ts_f, ts_b))
    fwd = jnp.transpose(outs_f, (1, 0, 2))               # (B, T, hh)
    bwd = jnp.transpose(outs_b[::-1], (1, 0, 2))
    return jnp.concatenate([fwd, bwd], axis=-1)          # (B, T, 2hh)


def init_params(key, cfg):
    ks = jax.random.split(key, 16)

    def nrm(k, shape, scale=0.02):
        return scale * jax.random.normal(k, shape, jnp.float32)

    H = cfg['lstm_hid_size']
    Hb = cfg['bert_hid_size']
    bi = cfg['biaffine_size']
    cls = cfg['label_num']
    ch = cfg['conv_hid_size']
    cin = cls + cfg['dist_emb_size'] + cfg['type_emb_size']
    hh = H // 2

    p = {
        'bert_emb': nrm(ks[0], (cfg['vocab_size'], Hb), 1.0),
        'dis_embs': nrm(ks[1], (20, cfg['dist_emb_size']), 1.0),
        'reg_embs': nrm(ks[2], (3, cfg['type_emb_size']), 1.0),
        'lstm': {
            'f': {'Wih': nrm(ks[3], (4 * hh, Hb)), 'Whh': nrm(ks[4], (4 * hh, hh)),
                  'bih': jnp.zeros((4 * hh,), jnp.float32), 'bhh': jnp.zeros((4 * hh,), jnp.float32)},
            'b': {'Wih': nrm(ks[5], (4 * hh, Hb)), 'Whh': nrm(ks[6], (4 * hh, hh)),
                  'bih': jnp.zeros((4 * hh,), jnp.float32), 'bhh': jnp.zeros((4 * hh,), jnp.float32)},
        },
        'mlp1_w': nrm(ks[7], (H, bi)), 'mlp1_b': jnp.zeros((bi,), jnp.float32),
        'mlp2_w': nrm(ks[8], (H, bi)), 'mlp2_b': jnp.zeros((bi,), jnp.float32),
        'biaffine_w': nrm(ks[9], (cls, bi + 1, bi + 1)),   # xavier_normal_ stand-in
    }
    blocks = []
    for r in range(cfg['num_res_blocks']):
        kb1, kb2, kb3 = jax.random.split(jax.random.fold_in(ks[10], r), 3)
        blocks.append({
            'conv1x1_w': nrm(kb1, (cin, ch)), 'conv1x1_b': jnp.zeros((ch,), jnp.float32),
            'conv3x3_w': nrm(kb2, (3, 3, ch, ch)), 'conv3x3_b': jnp.zeros((ch,), jnp.float32),
            'mlp_rel_w': nrm(kb3, (ch, cls)), 'mlp_rel_b': jnp.zeros((cls,), jnp.float32),
        })
    p['res_blocks'] = blocks
    return p


def model_forward(params, cfg, bert_inputs, grid_mask2d, dist_inputs, pieces2word, sent_length):
    # --- BERT encoder stand-in ---
    # TODO(synk): the pretrained chinese-roberta BERT stack has no clean Pallas equivalent
    # here; a deterministic token-embedding lookup stands in for `self.bert(...)[0]`.
    bert_embs = params['bert_emb'][bert_inputs]                     # [B, Lp, Hb]
    min_value = jnp.min(bert_embs)

    # masked max-pool of pieces -> word reps (Pallas, bert_embs streamed once as bf16)
    word_reps = masked_max_pool(bert_embs, pieces2word, min_value)  # [B, L, Hb]
    # emb dropout: identity (eval mode)

    # BiLSTM with packed-sequence semantics; both directions' input projections fused
    # into a single Pallas matmul, then one stacked lax.scan recurrence.
    B, T, Hb = word_reps.shape
    lstm = params['lstm']
    hh = lstm['f']['Whh'].shape[1]
    G = 4 * hh
    W_cat = jnp.concatenate([lstm['f']['Wih'].T, lstm['b']['Wih'].T], axis=1)   # (Hb, 8hh)
    b_cat = jnp.concatenate([lstm['f']['bih'] + lstm['f']['bhh'],
                             lstm['b']['bih'] + lstm['b']['bhh']], axis=0)
    xp = linear_pallas(word_reps.reshape(B * T, Hb), W_cat, b_cat, act=None)
    xp = xp.reshape(B, T, 2 * G)
    word_reps = _bilstm(xp[..., :G], xp[..., G:], sent_length,
                        lstm['f']['Whh'], lstm['b']['Whh'])          # [B, L, lstm_hid]

    # distance / region embeddings, pre-concatenated (constant across res blocks)
    dis_emb = params['dis_embs'][dist_inputs]                       # [B, L, L, dist]
    gm = grid_mask2d.astype(jnp.int32)
    reg_inputs = jnp.tril(gm) + gm
    reg_emb = params['reg_embs'][reg_inputs]                        # [B, L, L, type]
    de_emb = jnp.concatenate([dis_emb, reg_emb], axis=-1)           # [B, L, L, dist+type]

    # --- predictor: res_biaffine_output ---
    B, L, H = word_reps.shape
    bi = cfg['biaffine_size']
    ent_sub = linear_pallas(word_reps.reshape(B * L, H),
                            params['mlp1_w'], params['mlp1_b']).reshape(B, L, bi)
    ent_obj = linear_pallas(word_reps.reshape(B * L, H),
                            params['mlp2_w'], params['mlp2_b']).reshape(B, L, bi)
    ent_sub, ent_obj = rotary_position_embedding(ent_sub, ent_obj)

    ones = jnp.ones((B, L, 1), jnp.float32)
    x_aug = jnp.concatenate([ent_sub, ones], axis=-1)               # bias_x
    y_aug = jnp.concatenate([ent_obj, ones], axis=-1)               # bias_y
    o1 = biaffine(x_aug, y_aug, params['biaffine_w'])               # [B, L, L, cls]

    for blk in params['res_blocks']:
        o1 = res_block_fused(o1, de_emb, gm, blk)                   # fused residual block
    return o1


if __name__ == "__main__":
    cfg = dict(vocab_size=100, bert_hid_size=32, lstm_hid_size=32, dist_emb_size=8,
               type_emb_size=8, label_num=4, biaffine_size=32, conv_hid_size=16,
               ffnn_hid_size=32, num_res_blocks=1)
    B, L, Lp = 2, 8, 10

    key = jax.random.PRNGKey(0)
    pkey, dkey = jax.random.split(key)
    params = init_params(pkey, cfg)

    k1, k2 = jax.random.split(dkey)
    bert_inputs = jax.random.randint(k1, (B, Lp), 1, cfg['vocab_size'])
    dist_inputs = jax.random.randint(k2, (B, L, L), 0, 20)
    sent_length = jnp.array([8, 6], jnp.int32)

    ii = jnp.arange(L)
    grid_mask2d = ((ii[None, :, None] < sent_length[:, None, None]) &
                   (ii[None, None, :] < sent_length[:, None, None])).astype(jnp.int32)
    pp = jnp.arange(Lp)
    pieces2word = ((pp[None, None, :] == ii[None, :, None]) |
                   (pp[None, None, :] == ii[None, :, None] + 1)).astype(jnp.int32)

    out = model_forward(params, cfg, bert_inputs, grid_mask2d, dist_inputs, pieces2word, sent_length)
    out = jax.block_until_ready(out)
    assert out.shape == (B, L, L, cfg['label_num']), out.shape
    print("KERNEL_OK")
</pallas_src>

<mosaic_0001>
module attributes {stable_mosaic.version = 11 : i64} {
  func.func @_masked_max_kernel(%arg0: i32, %arg1: i32, %arg2: i32, %arg3: memref<1xf32, #tpu.memory_space<smem>>, %arg4: memref<1x16x32xbf16, #tpu.memory_space<vmem>>, %arg5: memref<1x16x8xf32, #tpu.memory_space<vmem>>, %arg6: memref<1x8x32xf32, #tpu.memory_space<vmem>>) attributes {dimension_semantics = [#tpu.dimension_semantics<parallel>, #tpu.dimension_semantics<parallel>, #tpu.dimension_semantics<arbitrary>], iteration_bounds = array<i64: 2, 1, 1>, scalar_prefetch = 0 : i64, scratch_operands = 0 : i64, tpu.core_type = #tpu.core_type<tc>, window_params = [{transform_indices = @transform_0, window_bounds = array<i64: 1>}, {transform_indices = @transform_1, window_bounds = array<i64: 1, 16, 32>}, {transform_indices = @transform_2, window_bounds = array<i64: 1, 16, 8>}, {transform_indices = @transform_3, window_bounds = array<i64: 1, 8, 32>}]} {
    %c0 = arith.constant 0 : index
    %0 = memref.load %arg3[%c0] : memref<1xf32, #tpu.memory_space<smem>>
    %c0_i32 = arith.constant 0 : i32
    %1 = arith.cmpi eq, %arg2, %c0_i32 : i32
    %2 = arith.extui %1 : i1 to i32
    %c0_i32_0 = arith.constant 0 : i32
    %3 = arith.cmpi ne, %2, %c0_i32_0 : i32
    scf.if %3 {
      %137 = vector.broadcast %0 : f32 to vector<1x8x32xf32>
      %c0_63 = arith.constant 0 : index
      %c0_64 = arith.constant 0 : index
      %c0_65 = arith.constant 0 : index
      %138 = vector.load %arg6[%c0_63, %c0_64, %c0_65] : memref<1x8x32xf32, #tpu.memory_space<vmem>>, vector<1x8x32xf32>
      tpu.vector_store %arg6[%c0_63, %c0_64, %c0_65], %137 {strides = array<i32>} : memref<1x8x32xf32, #tpu.memory_space<vmem>>, vector<1x8x32xf32>,
    } else {
    }
    %c0_1 = arith.constant 0 : index
    %c0_2 = arith.constant 0 : index
    %c0_3 = arith.constant 0 : index
    %4 = vector.load %arg4[%c0_1, %c0_2, %c0_3] : memref<1x16x32xbf16, #tpu.memory_space<vmem>>, vector<1x16x32xbf16>
    %5 = vector.shape_cast %4 : vector<1x16x32xbf16> to vector<16x32xbf16>
    %c0_4 = arith.constant 0 : index
    %c0_5 = arith.constant 0 : index
    %c0_6 = arith.constant 0 : index
    %6 = vector.load %arg5[%c0_4, %c0_5, %c0_6] : memref<1x16x8xf32, #tpu.memory_space<vmem>>, vector<1x16x8xf32>
    %7 = vector.shape_cast %6 : vector<1x16x8xf32> to vector<16x8xf32>
    %8 = arith.truncf %0 : f32 to bf16
    %9 = vector.extract_strided_slice %7 {offsets = [0, 0], sizes = [16, 1], strides = [1, 1]} : vector<16x8xf32> to vector<16x1xf32>
    %cst = arith.constant 0.000000e+00 : f32
    %10 = vector.broadcast %cst : f32 to vector<16x1xf32>
    %11 = arith.cmpf ogt, %9, %10 : vector<16x1xf32>
    %12 = vector.shape_cast %11 : vector<16x1xi1> to vector<16x1xi1>
    %13 = vector.broadcast %12 : vector<16x1xi1> to vector<16x32xi1>
    %14 = vector.broadcast %8 : bf16 to vector<16x32xbf16>
    %15 = arith.select %13, %5, %14 : vector<16x32xi1>, vector<16x32xbf16>
    %cst_7 = arith.constant dense<0xFF80> : vector<32xbf16>
    %16 = vector.multi_reduction <maximumf>, %15, %cst_7 [0] : vector<16x32xbf16> to vector<32xbf16>
    %17 = vector.shape_cast %16 : vector<32xbf16> to vector<1x32xbf16>
    %18 = arith.extf %17 : vector<1x32xbf16> to vector<1x32xf32>
    %c0_8 = arith.constant 0 : index
    %c0_9 = arith.constant 0 : index
    %c0_10 = arith.constant 0 : index
    %19 = vector.load %arg6[%c0_8, %c0_9, %c0_10] : memref<1x8x32xf32, #tpu.memory_space<vmem>>, vector<1x1x32xf32>
    %20 = vector.shape_cast %19 : vector<1x1x32xf32> to vector<1x32xf32>
    %21 = arith.maximumf %20, %18 : vector<1x32xf32>
    %c0_11 = arith.constant 0 : index
    %c0_12 = arith.constant 0 : index
    %c0_13 = arith.constant 0 : index
    %22 = vector.load %arg6[%c0_11, %c0_12, %c0_13] : memref<1x8x32xf32, #tpu.memory_space<vmem>>, vector<1x1x32xf32>
    %23 = vector.shape_cast %22 : vector<1x1x32xf32> to vector<1x32xf32>
    %24 = vector.shape_cast %21 : vector<1x32xf32> to vector<1x1x32xf32>
    tpu.vector_store %arg6[%c0_11, %c0_12, %c0_13], %24 {strides = array<i32>} : memref<1x8x32xf32, #tpu.memory_space<vmem>>, vector<1x1x32xf32>,
    %25 = vector.extract_strided_slice %7 {offsets = [0, 1], sizes = [16, 1], strides = [1, 1]} : vector<16x8xf32> to vector<16x1xf32>
    %cst_14 = arith.constant 0.000000e+00 : f32
    %26 = vector.broadcast %cst_14 : f32 to vector<16x1xf32>
    %27 = arith.cmpf ogt, %25, %26 : vector<16x1xf32>
    %28 = vector.shape_cast %27 : vector<16x1xi1> to vector<16x1xi1>
    %29 = vector.broadcast %28 : vector<16x1xi1> to vector<16x32xi1>
    %30 = vector.broadcast %8 : bf16 to vector<16x32xbf16>
    %31 = arith.select %29, %5, %30 : vector<16x32xi1>, vector<16x32xbf16>
    %cst_15 = arith.constant dense<0xFF80> : vector<32xbf16>
    %32 = vector.multi_reduction <maximumf>, %31, %cst_15 [0] : vector<16x32xbf16> to vector<32xbf16>
    %33 = vector.shape_cast %32 : vector<32xbf16> to vector<1x32xbf16>
    %34 = arith.extf %33 : vector<1x32xbf16> to vector<1x32xf32>
    %c0_16 = arith.constant 0 : index
    %c1 = arith.constant 1 : index
    %c0_17 = arith.constant 0 : index
    %35 = vector.load %arg6[%c0_16, %c1, %c0_17] : memref<1x8x32xf32, #tpu.memory_space<vmem>>, vector<1x1x32xf32>
    %36 = vector.shape_cast %35 : vector<1x1x32xf32> to vector<1x32xf32>
    %37 = arith.maximumf %36, %34 : vector<1x32xf32>
    %c0_18 = arith.constant 0 : index
    %c1_19 = arith.constant 1 : index
    %c0_20 = arith.constant 0 : index
    %38 = vector.load %arg6[%c0_18, %c1_19, %c0_20] : memref<1x8x32xf32, #tpu.memory_space<vmem>>, vector<1x1x32xf32>
    %39 = vector.shape_cast %38 : vector<1x1x32xf32> to vector<1x32xf32>
    %40 = vector.shape_cast %37 : vector<1x32xf32> to vector<1x1x32xf32>
    tpu.vector_store %arg6[%c0_18, %c1_19, %c0_20], %40 {strides = array<i32>} : memref<1x8x32xf32, #tpu.memory_space<vmem>>, vector<1x1x32xf32>,
    %41 = vector.extract_strided_slice %7 {offsets = [0, 2], sizes = [16, 1], strides = [1, 1]} : vector<16x8xf32> to vector<16x1xf32>
    %cst_21 = arith.constant 0.000000e+00 : f32
    %42 = vector.broadcast %cst_21 : f32 to vector<16x1xf32>
    %43 = arith.cmpf ogt, %41, %42 : vector<16x1xf32>
    %44 = vector.shape_cast %43 : vector<16x1xi1> to vector<16x1xi1>
    %45 = vector.broadcast %44 : vector<16x1xi1> to vector<16x32xi1>
    %46 = vector.broadcast %8 : bf16 to vector<16x32xbf16>
    %47 = arith.select %45, %5, %46 : vector<16x32xi1>, vector<16x32xbf16>
    %cst_22 = arith.constant dense<0xFF80> : vector<32xbf16>
    %48 = vector.multi_reduction <maximumf>, %47, %cst_22 [0] : vector<16x32xbf16> to vector<32xbf16>
    %49 = vector.shape_cast %48 : vector<32xbf16> to vector<1x32xbf16>
    %50 = arith.extf %49 : vector<1x32xbf16> to vector<1x32xf32>
    %c0_23 = arith.constant 0 : index
    %c2 = arith.constant 2 : index
    %c0_24 = arith.constant 0 : index
    %51 = vector.load %arg6[%c0_23, %c2, %c0_24] : memref<1x8x32xf32, #tpu.memory_space<vmem>>, vector<1x1x32xf32>
    %52 = vector.shape_cast %51 : vector<1x1x32xf32> to vector<1x32xf32>
    %53 = arith.maximumf %52, %50 : vector<1x32xf32>
    %c0_25 = arith.constant 0 : index
    %c2_26 = arith.constant 2 : index
    %c0_27 = arith.constant 0 : index
    %54 = vector.load %arg6[%c0_25, %c2_26, %c0_27] : memref<1x8x32xf32, #tpu.memory_space<vmem>>, vector<1x1x32xf32>
    %55 = vector.shape_cast %54 : vector<1x1x32xf32> to vector<1x32xf32>
    %56 = vector.shape_cast %53 : vector<1x32xf32> to vector<1x1x32xf32>
    tpu.vector_store %arg6[%c0_25, %c2_26, %c0_27], %56 {strides = array<i32>} : memref<1x8x32xf32, #tpu.memory_space<vmem>>, vector<1x1x32xf32>,
    %57 = vector.extract_strided_slice %7 {offsets = [0, 3], sizes = [16, 1], strides = [1, 1]} : vector<16x8xf32> to vector<16x1xf32>
    %cst_28 = arith.constant 0.000000e+00 : f32
    %58 = vector.broadcast %cst_28 : f32 to vector<16x1xf32>
    %59 = arith.cmpf ogt, %57, %58 : vector<16x1xf32>
    %60 = vector.shape_cast %59 : vector<16x1xi1> to vector<16x1xi1>
    %61 = vector.broadcast %60 : vector<16x1xi1> to vector<16x32xi1>
    %62 = vector.broadcast %8 : bf16 to vector<16x32xbf16>
    %63 = arith.select %61, %5, %62 : vector<16x32xi1>, vector<16x32xbf16>
    %cst_29 = arith.constant dense<0xFF80> : vector<32xbf16>
    %64 = vector.multi_reduction <maximumf>, %63, %cst_29 [0] : vector<16x32xbf16> to vector<32xbf16>
    %65 = vector.shape_cast %64 : vector<32xbf16> to vector<1x32xbf16>
    %66 = arith.extf %65 : vector<1x32xbf16> to vector<1x32xf32>
    %c0_30 = arith.constant 0 : index
    %c3 = arith.constant 3 : index
    %c0_31 = arith.constant 0 : index
    %67 = vector.load %arg6[%c0_30, %c3, %c0_31] : memref<1x8x32xf32, #tpu.memory_space<vmem>>, vector<1x1x32xf32>
    %68 = vector.shape_cast %67 : vector<1x1x32xf32> to vector<1x32xf32>
    %69 = arith.maximumf %68, %66 : vector<1x32xf32>
    %c0_32 = arith.constant 0 : index
    %c3_33 = arith.constant 3 : index
    %c0_34 = arith.constant 0 : index
    %70 = vector.load %arg6[%c0_32, %c3_33, %c0_34] : memref<1x8x32xf32, #tpu.memory_space<vmem>>, vector<1x1x32xf32>
    %71 = vector.shape_cast %70 : vector<1x1x32xf32> to vector<1x32xf32>
    %72 = vector.shape_cast %69 : vector<1x32xf32> to vector<1x1x32xf32>
    tpu.vector_store %arg6[%c0_32, %c3_33, %c0_34], %72 {strides = array<i32>} : memref<1x8x32xf32, #tpu.memory_space<vmem>>, vector<1x1x32xf32>,
    %73 = vector.extract_strided_slice %7 {offsets = [0, 4], sizes = [16, 1], strides = [1, 1]} : vector<16x8xf32> to vector<16x1xf32>
    %cst_35 = arith.constant 0.000000e+00 : f32
    %74 = vector.broadcast %cst_35 : f32 to vector<16x1xf32>
    %75 = arith.cmpf ogt, %73, %74 : vector<16x1xf32>
    %76 = vector.shape_cast %75 : vector<16x1xi1> to vector<16x1xi1>
    %77 = vector.broadcast %76 : vector<16x1xi1> to vector<16x32xi1>
    %78 = vector.broadcast %8 : bf16 to vector<16x32xbf16>
    %79 = arith.select %77, %5, %78 : vector<16x32xi1>, vector<16x32xbf16>
    %cst_36 = arith.constant dense<0xFF80> : vector<32xbf16>
    %80 = vector.multi_reduction <maximumf>, %79, %cst_36 [0] : vector<16x32xbf16> to vector<32xbf16>
    %81 = vector.shape_cast %80 : vector<32xbf16> to vector<1x32xbf16>
    %82 = arith.extf %81 : vector<1x32xbf16> to vector<1x32xf32>
    %c0_37 = arith.constant 0 : index
    %c4 = arith.constant 4 : index
    %c0_38 = arith.constant 0 : index
    %83 = vector.load %arg6[%c0_37, %c4, %c0_38] : memref<1x8x32xf32, #tpu.memory_space<vmem>>, vector<1x1x32xf32>
    %84 = vector.shape_cast %83 : vector<1x1x32xf32> to vector<1x32xf32>
    %85 = arith.maximumf %84, %82 : vector<1x32xf32>
    %c0_39 = arith.constant 0 : index
    %c4_40 = arith.constant 4 : index
    %c0_41 = arith.constant 0 : index
    %86 = vector.load %arg6[%c0_39, %c4_40, %c0_41] : memref<1x8x32xf32, #tpu.memory_space<vmem>>, vector<1x1x32xf32>
    %87 = vector.shape_cast %86 : vector<1x1x32xf32> to vector<1x32xf32>
    %88 = vector.shape_cast %85 : vector<1x32xf32> to vector<1x1x32xf32>
    tpu.vector_store %arg6[%c0_39, %c4_40, %c0_41], %88 {strides = array<i32>} : memref<1x8x32xf32, #tpu.memory_space<vmem>>, vector<1x1x32xf32>,
    %89 = vector.extract_strided_slice %7 {offsets = [0, 5], sizes = [16, 1], strides = [1, 1]} : vector<16x8xf32> to vector<16x1xf32>
    %cst_42 = arith.constant 0.000000e+00 : f32
    %90 = vector.broadcast %cst_42 : f32 to vector<16x1xf32>
    %91 = arith.cmpf ogt, %89, %90 : vector<16x1xf32>
    %92 = vector.shape_cast %91 : vector<16x1xi1> to vector<16x1xi1>
    %93 = vector.broadcast %92 : vector<16x1xi1> to vector<16x32xi1>
    %94 = vector.broadcast %8 : bf16 to vector<16x32xbf16>
    %95 = arith.select %93, %5, %94 : vector<16x32xi1>, vector<16x32xbf16>
    %cst_43 = arith.constant dense<0xFF80> : vector<32xbf16>
    %96 = vector.multi_reduction <maximumf>, %95, %cst_43 [0] : vector<16x32xbf16> to vector<32xbf16>
    %97 = vector.shape_cast %96 : vector<32xbf16> to vector<1x32xbf16>
    %98 = arith.extf %97 : vector<1x32xbf16> to vector<1x32xf32>
    %c0_44 = arith.constant 0 : index
    %c5 = arith.constant 5 : index
    %c0_45 = arith.constant 0 : index
    %99 = vector.load %arg6[%c0_44, %c5, %c0_45] : memref<1x8x32xf32, #tpu.memory_space<vmem>>, vector<1x1x32xf32>
    %100 = vector.shape_cast %99 : vector<1x1x32xf32> to vector<1x32xf32>
    %101 = arith.maximumf %100, %98 : vector<1x32xf32>
    %c0_46 = arith.constant 0 : index
    %c5_47 = arith.constant 5 : index
    %c0_48 = arith.constant 0 : index
    %102 = vector.load %arg6[%c0_46, %c5_47, %c0_48] : memref<1x8x32xf32, #tpu.memory_space<vmem>>, vector<1x1x32xf32>
    %103 = vector.shape_cast %102 : vector<1x1x32xf32> to vector<1x32xf32>
    %104 = vector.shape_cast %101 : vector<1x32xf32> to vector<1x1x32xf32>
    tpu.vector_store %arg6[%c0_46, %c5_47, %c0_48], %104 {strides = array<i32>} : memref<1x8x32xf32, #tpu.memory_space<vmem>>, vector<1x1x32xf32>,
    %105 = vector.extract_strided_slice %7 {offsets = [0, 6], sizes = [16, 1], strides = [1, 1]} : vector<16x8xf32> to vector<16x1xf32>
    %cst_49 = arith.constant 0.000000e+00 : f32
    %106 = vector.broadcast %cst_49 : f32 to vector<16x1xf32>
    %107 = arith.cmpf ogt, %105, %106 : vector<16x1xf32>
    %108 = vector.shape_cast %107 : vector<16x1xi1> to vector<16x1xi1>
    %109 = vector.broadcast %108 : vector<16x1xi1> to vector<16x32xi1>
    %110 = vector.broadcast %8 : bf16 to vector<16x32xbf16>
    %111 = arith.select %109, %5, %110 : vector<16x32xi1>, vector<16x32xbf16>
    %cst_50 = arith.constant dense<0xFF80> : vector<32xbf16>
    %112 = vector.multi_reduction <maximumf>, %111, %cst_50 [0] : vector<16x32xbf16> to vector<32xbf16>
    %113 = vector.shape_cast %112 : vector<32xbf16> to vector<1x32xbf16>
    %114 = arith.extf %113 : vector<1x32xbf16> to vector<1x32xf32>
    %c0_51 = arith.constant 0 : index
    %c6 = arith.constant 6 : index
    %c0_52 = arith.constant 0 : index
    %115 = vector.load %arg6[%c0_51, %c6, %c0_52] : memref<1x8x32xf32, #tpu.memory_space<vmem>>, vector<1x1x32xf32>
    %116 = vector.shape_cast %115 : vector<1x1x32xf32> to vector<1x32xf32>
    %117 = arith.maximumf %116, %114 : vector<1x32xf32>
    %c0_53 = arith.constant 0 : index
    %c6_54 = arith.constant 6 : index
    %c0_55 = arith.constant 0 : index
    %118 = vector.load %arg6[%c0_53, %c6_54, %c0_55] : memref<1x8x32xf32, #tpu.memory_space<vmem>>, vector<1x1x32xf32>
    %119 = vector.shape_cast %118 : vector<1x1x32xf32> to vector<1x32xf32>
    %120 = vector.shape_cast %117 : vector<1x32xf32> to vector<1x1x32xf32>
    tpu.vector_store %arg6[%c0_53, %c6_54, %c0_55], %120 {strides = array<i32>} : memref<1x8x32xf32, #tpu.memory_space<vmem>>, vector<1x1x32xf32>,
    %121 = vector.extract_strided_slice %7 {offsets = [0, 7], sizes = [16, 1], strides = [1, 1]} : vector<16x8xf32> to vector<16x1xf32>
    %cst_56 = arith.constant 0.000000e+00 : f32
    %122 = vector.broadcast %cst_56 : f32 to vector<16x1xf32>
    %123 = arith.cmpf ogt, %121, %122 : vector<16x1xf32>
    %124 = vector.shape_cast %123 : vector<16x1xi1> to vector<16x1xi1>
    %125 = vector.broadcast %124 : vector<16x1xi1> to vector<16x32xi1>
    %126 = vector.broadcast %8 : bf16 to vector<16x32xbf16>
    %127 = arith.select %125, %5, %126 : vector<16x32xi1>, vector<16x32xbf16>
    %cst_57 = arith.constant dense<0xFF80> : vector<32xbf16>
    %128 = vector.multi_reduction <maximumf>, %127, %cst_57 [0] : vector<16x32xbf16> to vector<32xbf16>
    %129 = vector.shape_cast %128 : vector<32xbf16> to vector<1x32xbf16>
    %130 = arith.extf %129 : vector<1x32xbf16> to vector<1x32xf32>
    %c0_58 = arith.constant 0 : index
    %c7 = arith.constant 7 : index
    %c0_59 = arith.constant 0 : index
    %131 = vector.load %arg6[%c0_58, %c7, %c0_59] : memref<1x8x32xf32, #tpu.memory_space<vmem>>, vector<1x1x32xf32>
    %132 = vector.shape_cast %131 : vector<1x1x32xf32> to vector<1x32xf32>
    %133 = arith.maximumf %132, %130 : vector<1x32xf32>
    %c0_60 = arith.constant 0 : index
    %c7_61 = arith.constant 7 : index
    %c0_62 = arith.constant 0 : index
    %134 = vector.load %arg6[%c0_60, %c7_61, %c0_62] : memref<1x8x32xf32, #tpu.memory_space<vmem>>, vector<1x1x32xf32>
    %135 = vector.shape_cast %134 : vector<1x1x32xf32> to vector<1x32xf32>
    %136 = vector.shape_cast %133 : vector<1x32xf32> to vector<1x1x32xf32>
    tpu.vector_store %arg6[%c0_60, %c7_61, %c0_62], %136 {strides = array<i32>} : memref<1x8x32xf32, #tpu.memory_space<vmem>>, vector<1x1x32xf32>,
    return
  }
  func.func @transform_0(%arg0: i32, %arg1: i32, %arg2: i32) -> i32 {
    %c0_i32 = arith.constant 0 : i32
    %c0_i32_0 = arith.constant 0 : i32
    return %c0_i32 : i32
  }
  func.func @transform_1(%arg0: i32, %arg1: i32, %arg2: i32) -> (i32, i32, i32) {
    %c0_i32 = arith.constant 0 : i32
    return %arg0, %arg2, %arg1 : i32, i32, i32
  }
  func.func @transform_2(%arg0: i32, %arg1: i32, %arg2: i32) -> (i32, i32, i32) {
    %c0_i32 = arith.constant 0 : i32
    %c0_i32_0 = arith.constant 0 : i32
    return %arg0, %arg2, %c0_i32 : i32, i32, i32
  }
  func.func @transform_3(%arg0: i32, %arg1: i32, %arg2: i32) -> (i32, i32, i32) {
    %c0_i32 = arith.constant 0 : i32
    %c0_i32_0 = arith.constant 0 : i32
    return %arg0, %c0_i32, %arg1 : i32, i32, i32
  }
}

</mosaic_0001>

<llo_original>
// kernel: tpu_custom_call.1
$region0: #{tpu_custom_call.1}
  #allocation0 [shape = 'u32[]', space=smem, size = 0x4, offset = 0x4, fixed_abs, tag = 'smem constant byte address 0x4 - core index']
  #allocation1 [shape = 'u32[144,128]{1,0:T(1,128)}', space=vmem, size = 0x12000, scoped, tag = 'internal scratch']
  #allocation2 [shape = 'f32[1]{0:T(128)S(6)}', space=smem, size = 0x200, scoped, tag = 'scoped memory for tpu_custom_call.1']
  %s0 = inlined_call_operand.<no memory space> [shape: f32[1], index: 0, kind: input, shape index: {}]
  %s1 = inlined_call_operand.vmem [shape: bf16[2,16,32], index: 1, kind: input, shape index: {}]
  %s2 = inlined_call_operand.vmem [shape: f32[1,16,8], index: 2, kind: input, shape index: {}]
  %s3 = inlined_call_operand.hbm [shape: f32[2,8,32], index: 3, kind: output, shape index: {}]
  %s4 = sld [smem:[#allocation0]]
  $region49: #{tpu_custom_call.1} parent=0
    _
  %s6 = ssub.s32 1, %s4
  %s7 = scalar_select 0, %s6, %s4
  %8 = sst [smem:[#allocation2]] %s0
  $region1: #{tpu_custom_call.1} parent=0
    #allocation3 [shape = 'u8[8192]{0}', space=vmem, size = 0x2000, scoped, tag = 'output window, operand 0']
    #allocation4 [shape = 's32[2]{0}', space=sflag, size = 0x8, scoped, tag = 'scoped memory for tpu_custom_call.1']
    %9 = vsyncpa [#allocation4], 0
    %s10 = scalar_lea.sflag [#allocation4], 1
    %11 = vsyncpa %s10, 0
    loop: start=0, step=1, limit=4
    $region2: #{tpu_custom_call.1} parent=1 // loop_pre_header
      _
    $region3: #{tpu_custom_call.1} parent=1 // loop_header
      %s13 = sphi 0, %s17
      %p14 = scmp.ge.s32.totalorder %s13, 4
      %s20 = sphi 0, %s39
      %s21 = sphi 0, %s35
      %s22 = sphi 0, %s31
      %s23 = sphi 0, %s20
      %s24 = sphi 0, %s21
      %s25 = sphi 0, %s22
      %s26 = sphi 0, %s23
      %s27 = sphi 0, %s24
      %s28 = sphi 0, %s25
      %s40 = sphi 0, %s40
      %s42 = sphi 0, %s40
      %s43 = sphi 0, %s42
      %s57 = sphi 0, %s43
      %s67 = sphi 0, %s69
      %s70 = sphi 0, %s67
      %s71 = sphi 0, %s70
      %s87 = sphi 0, %s71
      %s95 = sphi 0, %s97
      %s98 = sphi 0, %s95
      %s99 = sphi 0, %s98
      %s115 = sphi 0, %s99
      %s123 = sphi 0, %s125
      %s126 = sphi 0, %s123
      %s127 = sphi 0, %s126
      %s143 = sphi 0, %s127
    $region4: #{tpu_custom_call.1} parent=1 // loop_header_branch
      %16 = sbr.rel (%p14) target = $region8
    $region5: #{tpu_custom_call.1} parent=1 // loop_body
      %s18 = ssub.s32 %s13, 1
      %s19 = ssub.s32 %s13, 2
      %s29 = sadd.s32 1, %s22
      %p30 = scmp.ge.s32.totalorder %s29, 1
      %s31 = scalar_select %p30, 0, %s29
      %s32 = sadd.s32 1, %s21
      %s33 = scalar_select %p30, %s32, %s21
      %p34 = scmp.ge.s32.totalorder %s33, 1
      %s35 = scalar_select %p34, 0, %s33
      %s36 = sadd.s32 1, %s20
      %s37 = scalar_select %p34, %s36, %s20
      %p38 = scmp.ge.s32.totalorder %s37, 2
      %s39 = scalar_select %p38, 0, %s37
      %s41 = sadd.s32 %s40, 1
      %p44 = scmp.eq.s32.totalorder %s13, 1
      %p45 = scmp.ne.s32.totalorder %s40, %s42
      %p46 = scmp.eq.s32.totalorder %s13, 0
      %p47 = por %p45, %p46
      %p48 = scmp.ne.s32.totalorder %s40, %s42
      %p49 = scmp.eq.s32.totalorder %s18, 1
      %p50 = por %p48, %p49
      %p51 = scmp.ne.s32.totalorder %s42, %s43
      %p52 = scmp.eq.s32.totalorder %s18, 0
      %p53 = por %p51, %p52
      %p54 = scmp.ne.s32.totalorder %s42, %s43
      %p55 = scmp.eq.s32.totalorder %s19, 1
      %p56 = por %p54, %p55
      %p58 = scmp.ne.s32.totalorder %s43, %s57
      %p59 = scmp.eq.s32.totalorder %s19, 0
      %p60 = por %p58, %p59
      %s61 = ssub.s32 %s20, %s39
      %s62 = ssub.s32 %s22, %s31
      %s63 = sor.u32 %s61, %s62
      %s64 = ssub.s32 %s21, %s35
      %s65 = sor.u32 %s63, %s64
      %p66 = scmp.eq.s32.totalorder %s65, 0
      %s68 = sadd.s32 %s67, 1
      %s69 = scalar_select %p66, %s67, %s68
      %p72 = pneg %p66
      %p73 = scmp.eq.s32.totalorder %s13, 1
      %p74 = por %p72, %p73
      %p75 = scmp.ne.s32.totalorder %s67, %s70
      %p76 = scmp.eq.s32.totalorder %s13, 0
      %p77 = por %p75, %p76
      %p78 = scmp.ne.s32.totalorder %s67, %s70
      %p79 = scmp.eq.s32.totalorder %s18, 1
      %p80 = por %p78, %p79
      %p81 = scmp.ne.s32.totalorder %s70, %s71
      %p82 = scmp.eq.s32.totalorder %s18, 0
      %p83 = por %p81, %p82
      %p84 = scmp.ne.s32.totalorder %s70, %s71
      %p85 = scmp.eq.s32.totalorder %s19, 1
      %p86 = por %p84, %p85
      %p88 = scmp.ne.s32.totalorder %s71, %s87
      %p89 = scmp.eq.s32.totalorder %s19, 0
      %p90 = por %p88, %p89
      %s91 = ssub.s32 %s20, %s39
      %s92 = ssub.s32 %s22, %s31
      %s93 = sor.u32 %s91, %s92
      %p94 = scmp.eq.s32.totalorder %s93, 0
      %s96 = sadd.s32 %s95, 1
      %s97 = scalar_select %p94, %s95, %s96
      %p100 = pneg %p94
      %p101 = scmp.eq.s32.totalorder %s13, 1
      %p102 = por %p100, %p101
      %p103 = scmp.ne.s32.totalorder %s95, %s98
      %p104 = scmp.eq.s32.totalorder %s13, 0
      %p105 = por %p103, %p104
      %p106 = scmp.ne.s32.totalorder %s95, %s98
      %p107 = scmp.eq.s32.totalorder %s18, 1
      %p108 = por %p106, %p107
      %p109 = scmp.ne.s32.totalorder %s98, %s99
      %p110 = scmp.eq.s32.totalorder %s18, 0
      %p111 = por %p109, %p110
      %p112 = scmp.ne.s32.totalorder %s98, %s99
      %p113 = scmp.eq.s32.totalorder %s19, 1
      %p114 = por %p112, %p113
      %p116 = scmp.ne.s32.totalorder %s99, %s115
      %p117 = scmp.eq.s32.totalorder %s19, 0
      %p118 = por %p116, %p117
      %s119 = ssub.s32 %s20, %s39
      %s120 = ssub.s32 %s21, %s35
      %s121 = sor.u32 %s119, %s120
      %p122 = scmp.eq.s32.totalorder %s121, 0
      %s124 = sadd.s32 %s123, 1
      %s125 = scalar_select %p122, %s123, %s124
      %p128 = pneg %p122
      %p129 = scmp.eq.s32.totalorder %s13, 1
      %p130 = por %p128, %p129
      %p131 = scmp.ne.s32.totalorder %s123, %s126
      %p132 = scmp.eq.s32.totalorder %s13, 0
      %p133 = por %p131, %p132
      %p134 = scmp.ne.s32.totalorder %s123, %s126
      %p135 = scmp.eq.s32.totalorder %s18, 1
      %p136 = por %p134, %p135
      %p137 = scmp.ne.s32.totalorder %s126, %s127
      %p138 = scmp.eq.s32.totalorder %s18, 0
      %p139 = por %p137, %p138
      %p140 = scmp.ne.s32.totalorder %s126, %s127
      %p141 = scmp.eq.s32.totalorder %s19, 1
      %p142 = por %p140, %p141
      %p144 = scmp.ne.s32.totalorder %s127, %s143
      %p145 = scmp.eq.s32.totalorder %s19, 0
      %p146 = por %p144, %p145
      %p147 = scmp.le.s32.totalorder 1, %s13
      %p148 = scmp.lt.s32.totalorder %s13, 3
      %p149 = pnand %p147, %p148
      %p150 = pneg %p149
      // Predicated region
      $region9: #{tpu_custom_call.1} parent=5 // pred_check
        _
      $region10: #{tpu_custom_call.1} parent=5 // pred_check_branch
        %152 = sbr.rel (%p149) target = $region12
      $region11: #{tpu_custom_call.1} parent=5 // pred_region
        %s153 = ssub.s32 %s13, 1
        // Predicated region
        $region13: #{tpu_custom_call.1} parent=11 // pred_check
          %p154 = pneg %p53
        $region14: #{tpu_custom_call.1} parent=11 // pred_check_branch
          %156 = sbr.rel (%p154) target = $region16
        $region15: #{tpu_custom_call.1} parent=11 // pred_region
          _
        $region16: #{tpu_custom_call.1} parent=11 // pred_fallthru
          _
      $region12: #{tpu_custom_call.1} parent=5 // pred_fallthru
        _
      %p157 = scmp.lt.s32.totalorder %s13, 2
      // Predicated region
      $region17: #{tpu_custom_call.1} parent=5 // pred_check
        %p158 = pneg %p157
      $region18: #{tpu_custom_call.1} parent=5 // pred_check_branch
        %160 = sbr.rel (%p158) target = $region20
      $region19: #{tpu_custom_call.1} parent=5 // pred_region
        // Predicated region
        $region21: #{tpu_custom_call.1} parent=19 // pred_check
          %p161 = pneg %p77
        $region22: #{tpu_custom_call.1} parent=19 // pred_check_branch
          %163 = sbr.rel (%p161) target = $region24
        $region23: #{tpu_custom_call.1} parent=19 // pred_region
          %s164 = smul.u32 2, %s22
          %p165 = scmp.lt.s32.totalorder %s20, 1
          %s166 = scalar_select %p165, %s20, 1
          %p167 = scmp.lt.s32.totalorder %s164, 1
          %s168 = scalar_select %p167, %s164, 1
          %p169 = scmp.lt.s32.totalorder %s21, 0
          %s170 = scalar_select %p169, %s21, 0
          %s171 = sadd.s32 %s170, %s168
          %s172 = smul.addr %s166, 2
          %s173 = sadd.s32 %s171, %s172
          %s174 = smul.addr %s173, 4
          %s175 = scalar_lea.vmem %s1, %s174
          %s176 = smul.u32 2, %s22
        $region24: #{tpu_custom_call.1} parent=19 // pred_fallthru
          _
        // Predicated region
        $region25: #{tpu_custom_call.1} parent=19 // pred_check
          %p177 = pneg %p105
        $region26: #{tpu_custom_call.1} parent=19 // pred_check_branch
          %179 = sbr.rel (%p177) target = $region28
        $region27: #{tpu_custom_call.1} parent=19 // pred_region
          %s180 = smul.u32 2, %s22
          %p181 = scmp.lt.s32.totalorder %s20, 0
          %s182 = scalar_select %p181, %s20, 0
          %p183 = scmp.lt.s32.totalorder %s180, 1
          %s184 = scalar_select %p183, %s180, 1
          %s185 = smul.addr %s182, 2
          %s186 = sadd.s32 %s184, %s185
          %s187 = smul.addr %s186, 8
          %s188 = scalar_lea.vmem %s2, %s187
          %s189 = smul.u32 2, %s22
        $region28: #{tpu_custom_call.1} parent=19 // pred_fallthru
          _
      $region20: #{tpu_custom_call.1} parent=5 // pred_fallthru
        _
      %p190 = scmp.le.s32.totalorder 1, %s13
      %p191 = scmp.lt.s32.totalorder %s13, 3
      %p192 = pnand %p190, %p191
      %p193 = pneg %p192
      // Predicated region
      $region29: #{tpu_custom_call.1} parent=5 // pred_check
        _
      $region30: #{tpu_custom_call.1} parent=5 // pred_check_branch
        %195 = sbr.rel (%p192) target = $region32
      $region31: #{tpu_custom_call.1} parent=5 // pred_region
        %s196 = ssub.s32 %s13, 1
        %p197 = pneg %p53
        %p198 = pneg %p50
        %s199 = smul.u32 2, %s25
        %p200 = scmp.lt.s32.totalorder %s23, 1
        %s201 = scalar_select %p200, %s23, 1
        %p202 = scmp.lt.s32.totalorder %s199, 1
        %s203 = scalar_select %p202, %s199, 1
        %p204 = scmp.lt.s32.totalorder %s24, 0
        %s205 = scalar_select %p204, %s24, 0
        %s206 = sadd.s32 %s205, %s203
        %s207 = smul.addr %s201, 2
        %s208 = sadd.s32 %s206, %s207
        %s209 = smul.addr %s208, 4
        %s210 = scalar_lea.vmem %s1, %s209
        %p211 = pneg %p83
        %p212 = pneg %p80
        %s213 = smul.u32 2, %s25
        %p214 = scmp.lt.s32.totalorder %s23, 0
        %s215 = scalar_select %p214, %s23, 0
        %p216 = scmp.lt.s32.totalorder %s213, 1
        %s217 = scalar_select %p216, %s213, 1
        %s218 = smul.addr %s215, 2
        %s219 = sadd.s32 %s217, %s218
        %s220 = smul.addr %s219, 8
        %s221 = scalar_lea.vmem %s2, %s220
        %p222 = pneg %p111
        %p223 = pneg %p108
        %p224 = pneg %p139
        %p225 = pneg %p136
        %s226 = sand.u32 %s126, 1
        %s227 = scalar_lea.sflag [#allocation4], %s226
        %s228 = sand.u32 %s126, 1
        %s229 = smul.addr %s228, 8
        %s230 = scalar_lea.vmem [#allocation3], %s229
        %s231 = smul.u32 2, %s25
        %p232 = scmp.lt.s32.totalorder %s23, 1
        %s233 = scalar_select %p232, %s23, 1
        %p234 = scmp.lt.s32.totalorder %s231, 1
        %s235 = scalar_select %p234, %s231, 1
        %p236 = scmp.lt.s32.totalorder %s24, 0
        %s237 = scalar_select %p236, %s24, 0
        %s238 = sadd.s32 %s237, %s235
        %s239 = smul.addr %s233, 2
        %s240 = sadd.s32 %s238, %s239
        %s241 = smul.addr %s240, 4
        %s242 = scalar_lea.vmem %s1, %s241
        %s243 = smul.u32 2, %s25
        %s244 = smul.u32 2, %s25
        %p245 = scmp.lt.s32.totalorder %s23, 0
        %s246 = scalar_select %p245, %s23, 0
        %p247 = scmp.lt.s32.totalorder %s244, 1
        %s248 = scalar_select %p247, %s244, 1
        %s249 = smul.addr %s246, 2
        %s250 = sadd.s32 %s248, %s249
        %s251 = smul.addr %s250, 8
        %s252 = scalar_lea.vmem %s2, %s251
        %s253 = smul.u32 2, %s25
        %s255 = sld [smem:[#allocation2]]
        %p256 = scmp.eq.s32.totalorder %s25, 0
        // Predicated region
        $region33: #{tpu_custom_call.1} parent=31 // pred_check
          %p257 = pneg %p256
        $region34: #{tpu_custom_call.1} parent=31 // pred_check_branch
          %259 = sbr.rel (%p257) target = $region36
        $region35: #{tpu_custom_call.1} parent=31 // pred_region
          %v260 = vstv %s255
          %vm261 = vcmask 261120
          %262 = vst.msk [vmem:[%s230] sm:$0xff] %vm261, %v260
        $region36: #{tpu_custom_call.1} parent=31 // pred_fallthru
          _
        %v263 = vld [vmem:[%s242] sm:$0xf]
        %v264 = vld [vmem:[%s242 + $0x4] sm:$0xf]
        %v265 = vld [vmem:[%s252] sm:$0xff]
        %v266 = vld [vmem:[%s252 + $0x8] sm:$0xff]
        %p268 = scmp.ne.f32.partialorder %s255, %s255
        %s269 = sshrl.u32 %s255, 16
        %s270 = sand.u32 %s269, 1
        %s271 = sadd.s32 32767, %s270
        %s272 = sadd.s32 %s255, %s271
        %s273 = sand.u32 %s272, 4294901760
        %s274 = scalar_select %p268, 2143289344, %s273
        %s276 = sshrl.u32 %s274, 16
        %vm277 = vcmp.gt.f32.partialorder %v265, 0.0
        %vm278 = vcmp.gt.f32.partialorder %v266, 0.0
        %v279 = vsel %vm277, 1, 0
        %v280 = vsel %vm278, 1, 0
        %281 = vset.pattern.permute.xlu0 0
        %282 = vperm.xlu0 %281, %v279
        %v283 = vpop.permute.xlu0 %282
        %284 = vset.pattern.permute.xlu0 0
        %285 = vperm.xlu0 %284, %v280
        %v286 = vpop.permute.xlu0 %285
        %vm287 = vcmp.eq.s32.totalorder %v283, 1
        %vm288 = vcmp.eq.s32.totalorder %v286, 1
        %s289 = sshll.u32 %s276, 16
        %s290 = sor.u32 %s276, %s289
        %v291 = vstv %s290
        %vm293 = vmpackc.low %vm287, %vm287
        %vm294 = vmpackc.low %vm288, %vm288
        %v295 = vsel %vm293, %v263, %v291
        %v296 = vsel %vm294, %v264, %v291
        %v299 = vunpack.c.l.b16 %v295
        %v300 = vunpack.c.l.b16 %v296
        %v301 = vpack.c.b16 %v300, %v299
        %vm302 = vcmask 261120
        %v305 = vsel %vm302, %v301, 4286644096
        %v307 = vunpack.i.l.bf16 %v305
        %v308 = vunpack.i.h.bf16 %v305
        %v309 = vmax.f32 %v307, %v308
        %v310 = vrot.slane %v309, 4
        %v311 = vmax.f32 %v309, %v310
        %v312 = vrot.slane %v311, 2
        %v313 = vmax.f32 %v311, %v312
        %v314 = vrot.slane %v313, 1
        %v315 = vmax.f32 %v313, %v314
        %v316 = vpack.i.bf16 %v315, %v315
        %v317 = vunpack.c.l.bf16 %v316
        %v318 = vld [vmem:[%s230] sm:$0x1]
        %v319 = vmax.f32 %v318, %v317
        %vm320 = vcmask 253952
        %321 = vst.msk [vmem:[%s230] sm:$0x1] %vm320, %v319
        %322 = vset.pattern.permute.xlu0 1
        %323 = vperm.xlu0 %322, %v279
        %v324 = vpop.permute.xlu0 %323
        %325 = vset.pattern.permute.xlu0 1
        %326 = vperm.xlu0 %325, %v280
        %v327 = vpop.permute.xlu0 %326
        %vm328 = vcmp.eq.s32.totalorder %v324, 1
        %vm329 = vcmp.eq.s32.totalorder %v327, 1
        %vm330 = vmpackc.low %vm328, %vm328
        %vm331 = vmpackc.low %vm329, %vm329
        %v332 = vsel %vm330, %v263, %v291
        %v333 = vsel %vm331, %v264, %v291
        %v336 = vunpack.c.l.b16 %v332
        %v337 = vunpack.c.l.b16 %v333
        %v338 = vpack.c.b16 %v337, %v336
        %v340 = vsel %vm302, %v338, 4286644096
        %v342 = vunpack.i.l.bf16 %v340
        %v343 = vunpack.i.h.bf16 %v340
        %v344 = vmax.f32 %v342, %v343
        %v345 = vrot.slane %v344, 4
        %v346 = vmax.f32 %v344, %v345
        %v347 = vrot.slane %v346, 2
        %v348 = vmax.f32 %v346, %v347
        %v349 = vrot.slane %v348, 1
        %v350 = vmax.f32 %v348, %v349
        %v351 = vpack.i.bf16 %v350, %v350
        %v352 = vunpack.c.l.bf16 %v351
        %v353 = vld [vmem:[%s230 + $0x1] sm:$0x1]
        %v354 = vmax.f32 %v353, %v352
        %355 = vst.msk [vmem:[%s230 + $0x1] sm:$0x1] %vm320, %v354
        %356 = vset.pattern.permute.xlu0 2
        %357 = vperm.xlu0 %356, %v279
        %v358 = vpop.permute.xlu0 %357
        %359 = vset.pattern.permute.xlu0 2
        %360 = vperm.xlu0 %359, %v280
        %v361 = vpop.permute.xlu0 %360
        %vm362 = vcmp.eq.s32.totalorder %v358, 1
        %vm363 = vcmp.eq.s32.totalorder %v361, 1
        %vm364 = vmpackc.low %vm362, %vm362
        %vm365 = vmpackc.low %vm363, %vm363
        %v366 = vsel %vm364, %v263, %v291
        %v367 = vsel %vm365, %v264, %v291
        %v370 = vunpack.c.l.b16 %v366
        %v371 = vunpack.c.l.b16 %v367
        %v372 = vpack.c.b16 %v371, %v370
        %v374 = vsel %vm302, %v372, 4286644096
        %v376 = vunpack.i.l.bf16 %v374
        %v377 = vunpack.i.h.bf16 %v374
        %v378 = vmax.f32 %v376, %v377
        %v379 = vrot.slane %v378, 4
        %v380 = vmax.f32 %v378, %v379
        %v381 = vrot.slane %v380, 2
        %v382 = vmax.f32 %v380, %v381
        %v383 = vrot.slane %v382, 1
        %v384 = vmax.f32 %v382, %v383
        %v385 = vpack.i.bf16 %v384, %v384
        %v386 = vunpack.c.l.bf16 %v385
        %v387 = vld [vmem:[%s230 + $0x2] sm:$0x1]
        %v388 = vmax.f32 %v387, %v386
        %389 = vst.msk [vmem:[%s230 + $0x2] sm:$0x1] %vm320, %v388
        %390 = vset.pattern.permute.xlu0 3
        %391 = vperm.xlu0 %390, %v279
        %v392 = vpop.permute.xlu0 %391
        %393 = vset.pattern.permute.xlu0 3
        %394 = vperm.xlu0 %393, %v280
        %v395 = vpop.permute.xlu0 %394
        %vm396 = vcmp.eq.s32.totalorder %v392, 1
        %vm397 = vcmp.eq.s32.totalorder %v395, 1
        %vm398 = vmpackc.low %vm396, %vm396
        %vm399 = vmpackc.low %vm397, %vm397
        %v400 = vsel %vm398, %v263, %v291
        %v401 = vsel %vm399, %v264, %v291
        %v404 = vunpack.c.l.b16 %v400
        %v405 = vunpack.c.l.b16 %v401
        %v406 = vpack.c.b16 %v405, %v404
        %v408 = vsel %vm302, %v406, 4286644096
        %v410 = vunpack.i.l.bf16 %v408
        %v411 = vunpack.i.h.bf16 %v408
        %v412 = vmax.f32 %v410, %v411
        %v413 = vrot.slane %v412, 4
        %v414 = vmax.f32 %v412, %v413
        %v415 = vrot.slane %v414, 2
        %v416 = vmax.f32 %v414, %v415
        %v417 = vrot.slane %v416, 1
        %v418 = vmax.f32 %v416, %v417
        %v419 = vpack.i.bf16 %v418, %v418
        %v420 = vunpack.c.l.bf16 %v419
        %v421 = vld [vmem:[%s230 + $0x3] sm:$0x1]
        %v422 = vmax.f32 %v421, %v420
        %423 = vst.msk [vmem:[%s230 + $0x3] sm:$0x1] %vm320, %v422
        %424 = vset.pattern.permute.xlu0 4
        %425 = vperm.xlu0 %424, %v279
        %v426 = vpop.permute.xlu0 %425
        %427 = vset.pattern.permute.xlu0 4
        %428 = vperm.xlu0 %427, %v280
        %v429 = vpop.permute.xlu0 %428
        %vm430 = vcmp.eq.s32.totalorder %v426, 1
        %vm431 = vcmp.eq.s32.totalorder %v429, 1
        %vm432 = vmpackc.low %vm430, %vm430
        %vm433 = vmpackc.low %vm431, %vm431
        %v434 = vsel %vm432, %v263, %v291
        %v435 = vsel %vm433, %v264, %v291
        %v438 = vunpack.c.l.b16 %v434
        %v439 = vunpack.c.l.b16 %v435
        %v440 = vpack.c.b16 %v439, %v438
        %v442 = vsel %vm302, %v440, 4286644096
        %v444 = vunpack.i.l.bf16 %v442
        %v445 = vunpack.i.h.bf16 %v442
        %v446 = vmax.f32 %v444, %v445
        %v447 = vrot.slane %v446, 4
        %v448 = vmax.f32 %v446, %v447
        %v449 = vrot.slane %v448, 2
        %v450 = vmax.f32 %v448, %v449
        %v451 = vrot.slane %v450, 1
        %v452 = vmax.f32 %v450, %v451
        %v453 = vpack.i.bf16 %v452, %v452
        %v454 = vunpack.c.l.bf16 %v453
        %v455 = vld [vmem:[%s230 + $0x4] sm:$0x1]
        %v456 = vmax.f32 %v455, %v454
        %457 = vst.msk [vmem:[%s230 + $0x4] sm:$0x1] %vm320, %v456
        %458 = vset.pattern.permute.xlu0 5
        %459 = vperm.xlu0 %458, %v279
        %v460 = vpop.permute.xlu0 %459
        %461 = vset.pattern.permute.xlu0 5
        %462 = vperm.xlu0 %461, %v280
        %v463 = vpop.permute.xlu0 %462
        %vm464 = vcmp.eq.s32.totalorder %v460, 1
        %vm465 = vcmp.eq.s32.totalorder %v463, 1
        %vm466 = vmpackc.low %vm464, %vm464
        %vm467 = vmpackc.low %vm465, %vm465
        %v468 = vsel %vm466, %v263, %v291
        %v469 = vsel %vm467, %v264, %v291
        %v472 = vunpack.c.l.b16 %v468
        %v473 = vunpack.c.l.b16 %v469
        %v474 = vpack.c.b16 %v473, %v472
        %v476 = vsel %vm302, %v474, 4286644096
        %v478 = vunpack.i.l.bf16 %v476
        %v479 = vunpack.i.h.bf16 %v476
        %v480 = vmax.f32 %v478, %v479
        %v481 = vrot.slane %v480, 4
        %v482 = vmax.f32 %v480, %v481
        %v483 = vrot.slane %v482, 2
        %v484 = vmax.f32 %v482, %v483
        %v485 = vrot.slane %v484, 1
        %v486 = vmax.f32 %v484, %v485
        %v487 = vpack.i.bf16 %v486, %v486
        %v488 = vunpack.c.l.bf16 %v487
        %v489 = vld [vmem:[%s230 + $0x5] sm:$0x1]
        %v490 = vmax.f32 %v489, %v488
        %491 = vst.msk [vmem:[%s230 + $0x5] sm:$0x1] %vm320, %v490
        %492 = vset.pattern.permute.xlu0 6
        %493 = vperm.xlu0 %492, %v279
        %v494 = vpop.permute.xlu0 %493
        %495 = vset.pattern.permute.xlu0 6
        %496 = vperm.xlu0 %495, %v280
        %v497 = vpop.permute.xlu0 %496
        %vm498 = vcmp.eq.s32.totalorder %v494, 1
        %vm499 = vcmp.eq.s32.totalorder %v497, 1
        %vm500 = vmpackc.low %vm498, %vm498
        %vm501 = vmpackc.low %vm499, %vm499
        %v502 = vsel %vm500, %v263, %v291
        %v503 = vsel %vm501, %v264, %v291
        %v506 = vunpack.c.l.b16 %v502
        %v507 = vunpack.c.l.b16 %v503
        %v508 = vpack.c.b16 %v507, %v506
        %v510 = vsel %vm302, %v508, 4286644096
        %v512 = vunpack.i.l.bf16 %v510
        %v513 = vunpack.i.h.bf16 %v510
        %v514 = vmax.f32 %v512, %v513
        %v515 = vrot.slane %v514, 4
        %v516 = vmax.f32 %v514, %v515
        %v517 = vrot.slane %v516, 2
        %v518 = vmax.f32 %v516, %v517
        %v519 = vrot.slane %v518, 1
        %v520 = vmax.f32 %v518, %v519
        %v521 = vpack.i.bf16 %v520, %v520
        %v522 = vunpack.c.l.bf16 %v521
        %v523 = vld [vmem:[%s230 + $0x6] sm:$0x1]
        %v524 = vmax.f32 %v523, %v522
        %525 = vst.msk [vmem:[%s230 + $0x6] sm:$0x1] %vm320, %v524
        %526 = vset.pattern.permute.xlu0 7
        %527 = vperm.xlu0 %526, %v279
        %v528 = vpop.permute.xlu0 %527
        %529 = vset.pattern.permute.xlu0 7
        %530 = vperm.xlu0 %529, %v280
        %v531 = vpop.permute.xlu0 %530
        %vm532 = vcmp.eq.s32.totalorder %v528, 1
        %vm533 = vcmp.eq.s32.totalorder %v531, 1
        %vm534 = vmpackc.low %vm532, %vm532
        %vm535 = vmpackc.low %vm533, %vm533
        %v536 = vsel %vm534, %v263, %v291
        %v537 = vsel %vm535, %v264, %v291
        %v540 = vunpack.c.l.b16 %v536
        %v541 = vunpack.c.l.b16 %v537
        %v542 = vpack.c.b16 %v541, %v540
        %v544 = vsel %vm302, %v542, 4286644096
        %v546 = vunpack.i.l.bf16 %v544
        %v547 = vunpack.i.h.bf16 %v544
        %v548 = vmax.f32 %v546, %v547
        %v549 = vrot.slane %v548, 4
        %v550 = vmax.f32 %v548, %v549
        %v551 = vrot.slane %v550, 2
        %v552 = vmax.f32 %v550, %v551
        %v553 = vrot.slane %v552, 1
        %v554 = vmax.f32 %v552, %v553
        %v555 = vpack.i.bf16 %v554, %v554
        %v556 = vunpack.c.l.bf16 %v555
        %v557 = vld [vmem:[%s230 + $0x7] sm:$0x1]
        %v558 = vmax.f32 %v557, %v556
        %559 = vst.msk [vmem:[%s230 + $0x7] sm:$0x1] %vm320, %v558
        %s560 = sand.u32 %s126, 1
        %s561 = scalar_lea.sflag [#allocation4], %s560
        %s562 = sand.u32 %s126, 1
        %s563 = smul.addr %s562, 8
        %s564 = scalar_lea.vmem [#allocation3], %s563
        // Predicated region
        $region37: #{tpu_custom_call.1} parent=31 // pred_check
          %p565 = pneg %p136
        $region38: #{tpu_custom_call.1} parent=31 // pred_check_branch
          %567 = sbr.rel (%p565) target = $region40
        $region39: #{tpu_custom_call.1} parent=31 // pred_region
          %s569 = ssub.s32 128, 128
          %570 = vsyncadd %s561, %s569
          %s571 = sadd.s32 %s24, %s23
          %s572 = smul.addr %s571, 128
          %s573 = scalar_lea.hbm %s3, %s572
          %s575 = sshll.u32 %s564, 4
          %s576 = int_to_ptr.vmem [resolvable:$true] %s575
          %578 = dma.vmem_to_hbm [thread:$0]  %s576, 128, %s573, %s561
        $region40: #{tpu_custom_call.1} parent=31 // pred_fallthru
          _
      $region32: #{tpu_custom_call.1} parent=5 // pred_fallthru
        _
      %p579 = scmp.le.s32.totalorder 2, %s13
      // Predicated region
      $region41: #{tpu_custom_call.1} parent=5 // pred_check
        %p580 = pneg %p579
      $region42: #{tpu_custom_call.1} parent=5 // pred_check_branch
        %582 = sbr.rel (%p580) target = $region44
      $region43: #{tpu_custom_call.1} parent=5 // pred_region
        %s583 = ssub.s32 %s13, 2
        // Predicated region
        $region45: #{tpu_custom_call.1} parent=43 // pred_check
          %p584 = pneg %p142
        $region46: #{tpu_custom_call.1} parent=43 // pred_check_branch
          %586 = sbr.rel (%p584) target = $region48
        $region47: #{tpu_custom_call.1} parent=43 // pred_region
          %s587 = sand.u32 %s127, 1
          %s588 = scalar_lea.sflag [#allocation4], %s587
          %s589 = sand.u32 %s127, 1
          %s590 = smul.addr %s589, 8
          %s591 = scalar_lea.vmem [#allocation3], %s590
          %592 = dma.done %s588, 128
        $region48: #{tpu_custom_call.1} parent=43 // pred_fallthru
          _
      $region44: #{tpu_custom_call.1} parent=5 // pred_fallthru
        _
    $region6: #{tpu_custom_call.1} parent=1 // loop_footer
      %s17 = sadd.s32 1, %s13
    $region7: #{tpu_custom_call.1} parent=1 // loop_footer_branch
      %12 = sbr.rel target = $region3
    $region8: #{tpu_custom_call.1} parent=1 // loop_exit
      _
    %593 = vsyncpa [#allocation4], 1
    %s594 = scalar_lea.sflag [#allocation4], 1
    %595 = vsyncpa %s594, 1

</llo_original>
